<compile_context>
chip_gen: v5e
topology: v5e:2x2
jax: 0.10.0
libtpu: 0.0.40
codegen_flags: <defaults>
</compile_context>

<pallas_src>
import functools

import jax
import jax.numpy as jnp
from jax.experimental import pallas as pl
from jax.experimental.pallas import tpu as pltpu


# ---------------------------------------------------------------------------
# Hardware-aware sizing helpers
# ---------------------------------------------------------------------------

def _tpu_generation_info():
    """Best-effort (vmem_capacity_bytes, num_tensorcores, default_scoped_limit)."""
    kind = ""
    try:
        kind = jax.devices()[0].device_kind.lower()
    except Exception:
        pass

    vmem = None
    try:
        vmem = int(pltpu.get_tpu_info().vmem_capacity_bytes)
    except Exception:
        vmem = None
    if not vmem:
        vmem = (64 << 20) if ("7x" in kind or "v7" in kind) else (128 << 20)

    # Chips whose "parallel" grid axes shard across 2 TensorCores (megacore).
    two_tc = any(t in kind for t in ("v4", "v5p", "7x", "v7"))
    num_cores = 2 if two_tc else 1

    # Default scoped-VMEM limit: 16 MiB on v5e, 32 MiB on v6e/v7x.
    default_limit = (16 << 20) if ("v5 lite" in kind or "v5e" in kind) else (32 << 20)
    return vmem, num_cores, default_limit


def _vmem_budget(vmem_capacity):
    # Leave headroom for weights/biases, compiler internal scratch and small
    # temporaries: ~40 MiB on 64 MiB parts (v7x), ~96 MiB on 128 MiB parts.
    return max(min(vmem_capacity - (24 << 20), (vmem_capacity * 3) // 4), 8 << 20)


def _pick_batch_block(n, bytes_per_batch, vmem_budget, num_cores):
    """Largest divisor of n whose double-buffered in+out tiles fit vmem_budget.

    Only on 2-TC chips do we keep >= num_cores grid steps so the 'parallel'
    axis can shard across both cores; on 1-TC chips the grid is a serial loop
    and fewer, larger steps are strictly better.
    """
    cap = max(1, vmem_budget // max(1, 4 * bytes_per_batch))
    if num_cores > 1 and n >= num_cores:
        cap = min(cap, max(1, n // num_cores))
    nb = min(n, cap)
    while n % nb:
        nb -= 1
    return nb


def _pick_hw_block(hw, c, itemsize, vmem_budget):
    """Largest divisor of hw whose (C, thw) tiles fit the budget, preferring
    lane-aligned (multiple-of-128) blocks."""
    cap = max(1, vmem_budget // max(1, 4 * c * itemsize))
    if hw <= cap:
        return hw
    best, best128, i = 1, 0, 1
    while i * i <= hw:
        if hw % i == 0:
            for d in (i, hw // i):
                if d <= cap:
                    if d > best:
                        best = d
                    if d % 128 == 0 and d > best128:
                        best128 = d
        i += 1
    return best128 if best128 else best


# ---------------------------------------------------------------------------
# Kernels
# ---------------------------------------------------------------------------

def _se_fused_kernel(x_ref, w1_ref, b1_ref, w2_ref, b2_ref, o_ref):
    # x_ref: (Nb, C, HW) — C on sublane, HW on lane.
    x = x_ref[...]                                              # native dtype
    # AdaptiveAvgPool2d(1): mean over the spatial (lane) axis with f32
    # accumulation fused into the reduction (no whole-tile f32 upcast temp).
    pooled = jnp.mean(x, axis=-1, dtype=jnp.float32)            # (Nb, C)
    # 1x1 Conv (C->Cr) + ReLU, 1x1 Conv (Cr->C) + Sigmoid: two tiny f32 matmuls.
    h = jnp.dot(pooled, w1_ref[...],
                preferred_element_type=jnp.float32) + b1_ref[...]
    h = jnp.maximum(h, 0.0)
    s = jnp.dot(h, w2_ref[...],
                preferred_element_type=jnp.float32) + b2_ref[...]
    s = jax.nn.sigmoid(s)
    # Scale in the input dtype so the only large tensor is never upcast.
    o_ref[...] = (x * s[:, :, None].astype(x.dtype)).astype(o_ref.dtype)


def _se_gate_kernel(x_ref, w1_ref, b1_ref, w2_ref, b2_ref, gate_ref, acc_ref,
                    *, inv_hw):
    # Pass 1 of the large-plane fallback: accumulate per-(n, c) spatial sums
    # over an HW-tiled reduction axis; finalize the gate at the last HW step.
    hw = pl.program_id(1)

    @pl.when(hw == 0)
    def _():
        acc_ref[...] = jnp.zeros_like(acc_ref)

    acc_ref[...] += jnp.sum(x_ref[...], axis=-1, dtype=jnp.float32)   # (1, C)

    @pl.when(hw == pl.num_programs(1) - 1)
    def _():
        pooled = acc_ref[...] * inv_hw                                # (1, C)
        h = jnp.dot(pooled, w1_ref[...],
                    preferred_element_type=jnp.float32) + b1_ref[...]
        h = jnp.maximum(h, 0.0)
        s = jax.nn.sigmoid(jnp.dot(h, w2_ref[...],
                                   preferred_element_type=jnp.float32) + b2_ref[...])
        gate_ref[...] = s[:, :, None]                                 # (1, C, 1)


def _se_scale_kernel(x_ref, gate_ref, o_ref):
    # Pass 2 of the fallback: HW-tiled elementwise scale.
    x = x_ref[...]                                   # (1, C, thw)
    s = gate_ref[...]                                # (1, C, 1), f32
    o_ref[...] = (x * s.astype(x.dtype)).astype(o_ref.dtype)


# ---------------------------------------------------------------------------
# Wrapper
# ---------------------------------------------------------------------------

def se_block(x_nchw, w1, b1, w2, b2, *, donate_x=False, force_two_pass=False,
             _vmem_budget_override=None):
    """SEBlock forward.  x_nchw: (N, C, H, W) -> (N, C, H, W).

    Weights in matmul form: w1 (C, Cr), w2 (Cr, C) — the transpose of PyTorch
    Conv2d's (out, in, 1, 1) weights.
    """
    N, C, H, W = x_nchw.shape
    Cr = w1.shape[1]
    HW = H * W

    # Merge only the trailing dims — no transpose, no data movement.
    x = x_nchw.reshape(N, C, HW)
    b1_2d = b1.reshape(1, Cr)
    b2_2d = b2.reshape(1, C)

    itemsize = jnp.dtype(x.dtype).itemsize
    w_itemsize = jnp.dtype(w1.dtype).itemsize
    vmem_capacity, num_cores, default_limit = _tpu_generation_info()
    budget = _vmem_budget(vmem_capacity)
    if _vmem_budget_override is not None:
        budget = _vmem_budget_override

    # VMEM footprint accounting: double-buffered weights/biases + a fixed
    # margin for compiler internal scratch and small reduction temporaries.
    fixed_bytes = 2 * w_itemsize * (w1.size + w2.size + b1.size + b2.size)
    scratch_margin = 2 << 20
    bytes_per_batch = C * HW * itemsize

    transcendentals = N * (C + Cr)
    cost_fused = pl.CostEstimate(
        flops=2 * N * C * HW + 4 * N * C * Cr,
        transcendentals=transcendentals,
        bytes_accessed=2 * N * C * HW * itemsize + fixed_bytes // 2)

    def _limit(need):
        # Only set an explicit limit when the real footprint exceeds the
        # platform default; never pass a limit tighter than the footprint.
        if need <= default_limit:
            return None
        return min(max(int(need * 1.25), default_limit), vmem_capacity)

    use_two_pass = force_two_pass or (
        4 * bytes_per_batch + fixed_bytes + scratch_margin > budget)

    # TODO(synk): for HW not a multiple of 128 (e.g. 7x7, 14x14) repack the
    # output to a lane-dense (multiple-of-128 last dim) slab to avoid masked
    # partial stores; current layout is lane-dense only for 128-multiple HW.

    if not use_two_pass:
        # ---- Single fused pass: x read once, scaled output written once. ----
        nb = _pick_batch_block(N, bytes_per_batch, budget, num_cores)
        block_bytes = nb * bytes_per_batch
        vmem_need = 4 * block_bytes + fixed_bytes + scratch_margin

        out = pl.pallas_call(
            _se_fused_kernel,
            out_shape=jax.ShapeDtypeStruct((N, C, HW), x.dtype),
            grid_spec=pltpu.PrefetchScalarGridSpec(
                num_scalar_prefetch=0,
                grid=(N // nb,),
                in_specs=[
                    pl.BlockSpec((nb, C, HW), lambda b: (b, 0, 0)),   # x block
                    # Constant block index -> weights/biases stay VMEM-resident.
                    pl.BlockSpec((C, Cr), lambda b: (0, 0)),
                    pl.BlockSpec((1, Cr), lambda b: (0, 0)),
                    pl.BlockSpec((Cr, C), lambda b: (0, 0)),
                    pl.BlockSpec((1, C), lambda b: (0, 0)),
                ],
                out_specs=pl.BlockSpec((nb, C, HW), lambda b: (b, 0, 0)),
            ),
            compiler_params=pltpu.CompilerParams(
                dimension_semantics=("parallel",),
                vmem_limit_bytes=_limit(vmem_need),
            ),
            cost_estimate=cost_fused,
            input_output_aliases=({0: 0} if donate_x else {}),
        )(x, w1, b1_2d, w2, b2_2d)
        return out.reshape(N, C, H, W)

    # ---- Two-pass fallback: plane too large for the whole-plane-resident path.
    thw = _pick_hw_block(HW, C, itemsize, budget)
    n_hw = HW // thw
    block_bytes = C * thw * itemsize

    gate = pl.pallas_call(
        functools.partial(_se_gate_kernel, inv_hw=1.0 / float(HW)),
        out_shape=jax.ShapeDtypeStruct((N, C, 1), jnp.float32),
        grid_spec=pltpu.PrefetchScalarGridSpec(
            num_scalar_prefetch=0,
            grid=(N, n_hw),
            in_specs=[
                pl.BlockSpec((1, C, thw), lambda n, h: (n, 0, h)),
                pl.BlockSpec((C, Cr), lambda n, h: (0, 0)),
                pl.BlockSpec((1, Cr), lambda n, h: (0, 0)),
                pl.BlockSpec((Cr, C), lambda n, h: (0, 0)),
                pl.BlockSpec((1, C), lambda n, h: (0, 0)),
            ],
            out_specs=pl.BlockSpec((1, C, 1), lambda n, h: (n, 0, 0)),
            scratch_shapes=[pltpu.VMEM((1, C), jnp.float32)],
        ),
        compiler_params=pltpu.CompilerParams(
            dimension_semantics=("parallel", "arbitrary"),
            vmem_limit_bytes=_limit(2 * block_bytes + fixed_bytes + scratch_margin),
        ),
        cost_estimate=pl.CostEstimate(
            flops=N * C * HW + 4 * N * C * Cr,
            transcendentals=transcendentals,
            bytes_accessed=N * C * HW * itemsize),
    )(x, w1, b1_2d, w2, b2_2d)

    out = pl.pallas_call(
        _se_scale_kernel,
        out_shape=jax.ShapeDtypeStruct((N, C, HW), x.dtype),
        grid_spec=pltpu.PrefetchScalarGridSpec(
            num_scalar_prefetch=0,
            grid=(N, n_hw),
            in_specs=[
                pl.BlockSpec((1, C, thw), lambda n, h: (n, 0, h)),
                pl.BlockSpec((1, C, 1), lambda n, h: (n, 0, 0)),
            ],
            out_specs=pl.BlockSpec((1, C, thw), lambda n, h: (n, 0, h)),
        ),
        compiler_params=pltpu.CompilerParams(
            dimension_semantics=("parallel", "parallel"),
            vmem_limit_bytes=_limit(4 * block_bytes + scratch_margin),
        ),
        cost_estimate=pl.CostEstimate(
            flops=N * C * HW, transcendentals=0,
            bytes_accessed=2 * N * C * HW * itemsize),
        input_output_aliases=({0: 0} if donate_x else {}),
    )(x, gate)
    return out.reshape(N, C, H, W)


def _reference(x_nchw, w1, b1, w2, b2):
    # Pure-JAX reference of the same math (for self-check).
    pooled = jnp.mean(x_nchw.astype(jnp.float32), axis=(2, 3))          # (N, C)
    h = jnp.maximum(pooled @ w1 + b1, 0.0)                              # (N, Cr)
    s = jax.nn.sigmoid(h @ w2 + b2)                                     # (N, C)
    return x_nchw * s[:, :, None, None].astype(x_nchw.dtype)


if __name__ == "__main__":
    # SEBlock(channels=16, reduction=8) on a (2, 16, 16, 16) input.
    N, C, H, W = 2, 16, 16, 16
    reduction = 8
    Cr = C // reduction

    key = jax.random.PRNGKey(0)
    kx, k1, kb1, k2, kb2 = jax.random.split(key, 5)

    x = jax.random.normal(kx, (N, C, H, W), dtype=jnp.float32)
    # Params in matmul form (in, out) — transpose of Conv2d (out, in, 1, 1).
    w1 = jax.random.normal(k1, (C, Cr), dtype=jnp.float32) * 0.1
    b1 = jax.random.normal(kb1, (Cr,), dtype=jnp.float32) * 0.1
    w2 = jax.random.normal(k2, (Cr, C), dtype=jnp.float32) * 0.1
    b2 = jax.random.normal(kb2, (C,), dtype=jnp.float32) * 0.1

    ref = _reference(x, w1, b1, w2, b2)

    # Primary fused path.
    out_fused = se_block(x, w1, b1, w2, b2)
    jax.block_until_ready(out_fused)
    assert out_fused.shape == (N, C, H, W)
    assert jnp.allclose(out_fused, ref, atol=1e-5, rtol=1e-5)

    # Exercise the two-pass large-plane fallback with an artificially small
    # VMEM budget so the HW axis is actually tiled (thw=128, 2 reduction steps).
    out_split = se_block(x, w1, b1, w2, b2, force_two_pass=True,
                         _vmem_budget_override=128 * C * 4 * 4)
    jax.block_until_ready(out_split)
    assert out_split.shape == (N, C, H, W)
    assert jnp.allclose(out_split, ref, atol=1e-5, rtol=1e-5)

    print("KERNEL_OK")
</pallas_src>

<mosaic_0001>
module attributes {stable_mosaic.version = 11 : i64} {
  func.func @_se_fused_kernel(%arg0: i32, %arg1: memref<2x16x256xf32, #tpu.memory_space<vmem>>, %arg2: memref<16x2xf32, #tpu.memory_space<vmem>>, %arg3: memref<1x2xf32, #tpu.memory_space<vmem>>, %arg4: memref<2x16xf32, #tpu.memory_space<vmem>>, %arg5: memref<1x16xf32, #tpu.memory_space<vmem>>, %arg6: memref<2x16x256xf32, #tpu.memory_space<vmem>>) attributes {dimension_semantics = [#tpu.dimension_semantics<parallel>], iteration_bounds = array<i64: 1>, scalar_prefetch = 0 : i64, scratch_operands = 0 : i64, tpu.core_type = #tpu.core_type<tc>, window_params = [{transform_indices = @transform_0, window_bounds = array<i64: 2, 16, 256>}, {pipeline_mode = #tpu.pipeline_mode<synchronous>, transform_indices = @transform_1, window_bounds = array<i64: 16, 2>}, {pipeline_mode = #tpu.pipeline_mode<synchronous>, transform_indices = @transform_2, window_bounds = array<i64: 1, 2>}, {pipeline_mode = #tpu.pipeline_mode<synchronous>, transform_indices = @transform_3, window_bounds = array<i64: 2, 16>}, {pipeline_mode = #tpu.pipeline_mode<synchronous>, transform_indices = @transform_4, window_bounds = array<i64: 1, 16>}, {transform_indices = @transform_5, window_bounds = array<i64: 2, 16, 256>}]} {
    %c0 = arith.constant 0 : index
    %c0_0 = arith.constant 0 : index
    %c0_1 = arith.constant 0 : index
    %0 = vector.load %arg1[%c0, %c0_0, %c0_1] : memref<2x16x256xf32, #tpu.memory_space<vmem>>, vector<2x16x256xf32>
    %cst = arith.constant dense<0.000000e+00> : vector<2x16xf32>
    %1 = vector.multi_reduction <add>, %0, %cst [2] : vector<2x16x256xf32> to vector<2x16xf32>
    %cst_2 = arith.constant 2.560000e+02 : f32
    %2 = vector.broadcast %cst_2 : f32 to vector<2x16xf32>
    %3 = arith.divf %1, %2 : vector<2x16xf32>
    %c0_3 = arith.constant 0 : index
    %c0_4 = arith.constant 0 : index
    %4 = vector.load %arg2[%c0_3, %c0_4] : memref<16x2xf32, #tpu.memory_space<vmem>>, vector<16x2xf32>
    %cst_5 = arith.constant dense<0.000000e+00> : vector<2x2xf32>
    %5 = tpu.matmul %3, %4, %cst_5 {dimension_numbers = #tpu.dot_dimension_numbers<[1], [0], [0], [1], [0, 0, 1, 1], [], []>} : vector<2x16xf32>, vector<16x2xf32>, vector<2x2xf32> -> vector<2x2xf32>
    %c0_6 = arith.constant 0 : index
    %c0_7 = arith.constant 0 : index
    %6 = vector.load %arg3[%c0_6, %c0_7] : memref<1x2xf32, #tpu.memory_space<vmem>>, vector<1x2xf32>
    %7 = vector.broadcast %6 : vector<1x2xf32> to vector<2x2xf32>
    %8 = arith.addf %5, %7 : vector<2x2xf32>
    %cst_8 = arith.constant 0.000000e+00 : f32
    %9 = vector.broadcast %cst_8 : f32 to vector<2x2xf32>
    %10 = arith.maximumf %8, %9 : vector<2x2xf32>
    %c0_9 = arith.constant 0 : index
    %c0_10 = arith.constant 0 : index
    %11 = vector.load %arg4[%c0_9, %c0_10] : memref<2x16xf32, #tpu.memory_space<vmem>>, vector<2x16xf32>
    %cst_11 = arith.constant dense<0.000000e+00> : vector<2x16xf32>
    %12 = tpu.matmul %10, %11, %cst_11 {dimension_numbers = #tpu.dot_dimension_numbers<[1], [0], [0], [1], [0, 0, 1, 1], [], []>} : vector<2x2xf32>, vector<2x16xf32>, vector<2x16xf32> -> vector<2x16xf32>
    %c0_12 = arith.constant 0 : index
    %c0_13 = arith.constant 0 : index
    %13 = vector.load %arg5[%c0_12, %c0_13] : memref<1x16xf32, #tpu.memory_space<vmem>>, vector<1x16xf32>
    %14 = vector.broadcast %13 : vector<1x16xf32> to vector<2x16xf32>
    %15 = arith.addf %12, %14 : vector<2x16xf32>
    %16 = arith.negf %15 : vector<2x16xf32>
    %17 = math.exp %16 : vector<2x16xf32>
    %cst_14 = arith.constant 1.000000e+00 : f32
    %18 = vector.broadcast %cst_14 : f32 to vector<2x16xf32>
    %19 = arith.addf %18, %17 : vector<2x16xf32>
    %20 = arith.divf %18, %19 : vector<2x16xf32>
    %21 = vector.shape_cast %20 : vector<2x16xf32> to vector<2x16x1xf32>
    %22 = vector.broadcast %21 : vector<2x16x1xf32> to vector<2x16x256xf32>
    %23 = arith.mulf %0, %22 : vector<2x16x256xf32>
    %c0_15 = arith.constant 0 : index
    %c0_16 = arith.constant 0 : index
    %c0_17 = arith.constant 0 : index
    %24 = vector.load %arg6[%c0_15, %c0_16, %c0_17] : memref<2x16x256xf32, #tpu.memory_space<vmem>>, vector<2x16x256xf32>
    tpu.vector_store %arg6[%c0_15, %c0_16, %c0_17], %23 {strides = array<i32>} : memref<2x16x256xf32, #tpu.memory_space<vmem>>, vector<2x16x256xf32>,
    return
  }
  func.func @transform_0(%arg0: i32) -> (i32, i32, i32) {
    %c0_i32 = arith.constant 0 : i32
    %c0_i32_0 = arith.constant 0 : i32
    %c0_i32_1 = arith.constant 0 : i32
    return %arg0, %c0_i32, %c0_i32_0 : i32, i32, i32
  }
  func.func @transform_1(%arg0: i32) -> (i32, i32) {
    %c0_i32 = arith.constant 0 : i32
    %c0_i32_0 = arith.constant 0 : i32
    %c0_i32_1 = arith.constant 0 : i32
    return %c0_i32, %c0_i32_0 : i32, i32
  }
  func.func @transform_2(%arg0: i32) -> (i32, i32) {
    %c0_i32 = arith.constant 0 : i32
    %c0_i32_0 = arith.constant 0 : i32
    %c0_i32_1 = arith.constant 0 : i32
    return %c0_i32, %c0_i32_0 : i32, i32
  }
  func.func @transform_3(%arg0: i32) -> (i32, i32) {
    %c0_i32 = arith.constant 0 : i32
    %c0_i32_0 = arith.constant 0 : i32
    %c0_i32_1 = arith.constant 0 : i32
    return %c0_i32, %c0_i32_0 : i32, i32
  }
  func.func @transform_4(%arg0: i32) -> (i32, i32) {
    %c0_i32 = arith.constant 0 : i32
    %c0_i32_0 = arith.constant 0 : i32
    %c0_i32_1 = arith.constant 0 : i32
    return %c0_i32, %c0_i32_0 : i32, i32
  }
  func.func @transform_5(%arg0: i32) -> (i32, i32, i32) {
    %c0_i32 = arith.constant 0 : i32
    %c0_i32_0 = arith.constant 0 : i32
    %c0_i32_1 = arith.constant 0 : i32
    return %arg0, %c0_i32, %c0_i32_0 : i32, i32, i32
  }
}

</mosaic_0001>

<llo_original>
// kernel: tpu_custom_call.1
$region0: #{tpu_custom_call.1}
  #allocation0 [shape = 'u32[]', space=smem, size = 0x4, offset = 0x4, fixed_abs, tag = 'smem constant byte address 0x4 - core index']
  #allocation1 [shape = 'u32[72,128]{1,0:T(1,128)}', space=vmem, size = 0x9000, scoped, tag = 'internal scratch']
  %s0 = inlined_call_operand.hbm [shape: f32[2,16,256], index: 0, kind: input, shape index: {}]
  %s1 = inlined_call_operand.vmem [shape: f32[16,2], index: 1, kind: input, shape index: {}]
  %s2 = inlined_call_operand.vmem [shape: f32[1,2], index: 2, kind: input, shape index: {}]
  %s3 = inlined_call_operand.vmem [shape: f32[2,16], index: 3, kind: input, shape index: {}]
  %s4 = inlined_call_operand.vmem [shape: f32[1,16], index: 4, kind: input, shape index: {}]
  %s5 = inlined_call_operand.hbm [shape: f32[2,16,256], index: 5, kind: output, shape index: {}]
  %s6 = sld [smem:[#allocation0]]
  $region34: #{tpu_custom_call.1} parent=0
    _
  %s8 = ssub.s32 1, %s6
  %s9 = scalar_select 0, %s8, %s6
  $region1: #{tpu_custom_call.1} parent=0
    #allocation2 [shape = 'u8[32768]{0}', space=vmem, size = 0x8000, scoped, tag = 'input window, operand 0, single buffered']
    #allocation3 [shape = 's32[1]{0}', space=sflag, size = 0x4, scoped, tag = 'scoped memory for tpu_custom_call.1']
    #allocation4 [shape = 's32[1]{0}', space=sflag, size = 0x4, scoped, tag = 'scoped memory for tpu_custom_call.1']
    #allocation5 [shape = 'u8[32768]{0}', space=vmem, size = 0x8000, scoped, tag = 'output window, operand 0, single buffered']
    %10 = vsyncpa [#allocation3], 0
    %11 = vsyncpa [#allocation4], 0
    // Predicated region
    $region2: #{tpu_custom_call.1} parent=1 // pred_check
      _
    $region3: #{tpu_custom_call.1} parent=1 // pred_check_branch
      %13 = sbr.rel (0) target = $region5
    $region4: #{tpu_custom_call.1} parent=1 // pred_region
      %15 = vsyncadd [#allocation3], 0
      %s16 = sshll.u32 %s0, 4
      %s17 = int_to_ptr.hbm [resolvable:$true] %s16
      %s18 = sshll.u32 [#allocation2], 4
      %s19 = int_to_ptr.vmem [resolvable:$true] %s18
      %24 = dma.hbm_to_vmem [thread:$0]  %s17, 1024, %s19, [#allocation3], 256, 256, 16
    $region5: #{tpu_custom_call.1} parent=1 // pred_fallthru
      _
    // Predicated region
    $region6: #{tpu_custom_call.1} parent=1 // pred_check
      _
    $region7: #{tpu_custom_call.1} parent=1 // pred_check_branch
      %26 = sbr.rel (0) target = $region9
    $region8: #{tpu_custom_call.1} parent=1 // pred_region
      _
    $region9: #{tpu_custom_call.1} parent=1 // pred_fallthru
      _
    // Predicated region
    $region10: #{tpu_custom_call.1} parent=1 // pred_check
      _
    $region11: #{tpu_custom_call.1} parent=1 // pred_check_branch
      %28 = sbr.rel (0) target = $region13
    $region12: #{tpu_custom_call.1} parent=1 // pred_region
      _
    $region13: #{tpu_custom_call.1} parent=1 // pred_fallthru
      _
    // Predicated region
    $region14: #{tpu_custom_call.1} parent=1 // pred_check
      _
    $region15: #{tpu_custom_call.1} parent=1 // pred_check_branch
      %30 = sbr.rel (0) target = $region17
    $region16: #{tpu_custom_call.1} parent=1 // pred_region
      _
    $region17: #{tpu_custom_call.1} parent=1 // pred_fallthru
      _
    // Predicated region
    $region18: #{tpu_custom_call.1} parent=1 // pred_check
      _
    $region19: #{tpu_custom_call.1} parent=1 // pred_check_branch
      %32 = sbr.rel (0) target = $region21
    $region20: #{tpu_custom_call.1} parent=1 // pred_region
      _
    $region21: #{tpu_custom_call.1} parent=1 // pred_fallthru
      _
    // Predicated region
    $region22: #{tpu_custom_call.1} parent=1 // pred_check
      _
    $region23: #{tpu_custom_call.1} parent=1 // pred_check_branch
      %34 = sbr.rel (0) target = $region25
    $region24: #{tpu_custom_call.1} parent=1 // pred_region
      %36 = dma.done [#allocation3], 1024
    $region25: #{tpu_custom_call.1} parent=1 // pred_fallthru
      _
    %v37 = vld [vmem:[#allocation2] sm:$0xff]
    %v38 = vld [vmem:[#allocation2 + $0x8] sm:$0xff]
    %v39 = vld [vmem:[#allocation2 + $0x10] sm:$0xff]
    %v40 = vld [vmem:[#allocation2 + $0x18] sm:$0xff]
    %v41 = vld [vmem:[#allocation2 + $0x20] sm:$0xff]
    %v42 = vld [vmem:[#allocation2 + $0x28] sm:$0xff]
    %v43 = vld [vmem:[#allocation2 + $0x30] sm:$0xff]
    %v44 = vld [vmem:[#allocation2 + $0x38] sm:$0xff]
    %v45 = vadd.f32 %v37, %v38
    %46 = vadd.xlane.f32.xlu0 %v45
    %v47 = vpop.xlane.xlu0 %46
    %v48 = vadd.f32 %v39, %v40
    %49 = vadd.xlane.f32.xlu0 %v48
    %v50 = vpop.xlane.xlu0 %49
    %v51 = vadd.f32 %v41, %v42
    %52 = vadd.xlane.f32.xlu0 %v51
    %v53 = vpop.xlane.xlu0 %52
    %v54 = vadd.f32 %v43, %v44
    %55 = vadd.xlane.f32.xlu0 %v54
    %v56 = vpop.xlane.xlu0 %55
    %v57 = vrcp.pop 256.0
    %v58 = vmul.f32 256.0, %v57
    %v59 = vsub.f32 1.0, %v58
    %v60 = vmul.f32 %v57, %v59
    %v61 = vadd.f32 %v57, %v60
    %vm62 = vweird.f32 %v57
    %v63 = vsel %vm62, %v57, %v61
    %v64 = vmul.f32 %v47, %v63
    %v65 = vmul.f32 %v50, %v63
    %v66 = vmul.f32 %v53, %v63
    %v67 = vmul.f32 %v56, %v63
    %v68 = vld [vmem:[%s1] sm:$0xff]
    %v69 = vld [vmem:[%s1 + $0x8] sm:$0xff]
    %v70 = vld [vmem:[%s2] sm:$0x1]
    %v72 = vperm.slane %v70, 0
    %v78 = vlaneseq
    %v79 = vand.u32 %v78, 127
    %v80 = vperm.slane %v64, %v79
    %v81 = vadd.s32 %v79, 4294967288
    %v82 = vperm.slane %v65, %v81
    %vm83 = vcmask 130112
    %v84 = vsel %vm83, %v82, %v80
    %v85 = vperm.slane %v66, %v79
    %v86 = vperm.slane %v67, %v81
    %v87 = vsel %vm83, %v86, %v85
    %vm88 = vcmask 1041409
    %v89 = vsel %vm88, %v87, %v84
    %vm90 = vcmask 130048
    %v91 = vsel %vm90, %v89, 0
    %93 = vmatpush.msra.mxu0 0.0
    %94 = vmatpush.msra.mxu0 0.0
    %95 = vmatpush.msra.mxu0 0.0
    %96 = vmatpush.msra.mxu0 0.0
    %97 = vmatpush.msra.mxu0 0.0
    %98 = vmatpush.msra.mxu0 0.0
    %99 = vmatpush.msra.mxu0 0.0
    %100 = vmatpush.msra.mxu0 0.0
    %101 = vmatpush.msra.mxu0 0.0
    %102 = vmatpush.msra.mxu0 0.0
    %103 = vmatpush.msra.mxu0 0.0
    %104 = vmatpush.msra.mxu0 0.0
    %105 = vmatpush.msra.mxu0 0.0
    %106 = vmatpush.msra.mxu0 0.0
    %107 = vmatpush.msra.mxu0 %v69
    %108 = vmatpush.msra.mxu0 %v68
    %109 = vmatmul.f32.gmra.mxu0 %v91
    %v110 = vpop.f32.mrf.mxu0
    %v111 = vadd.f32 %v72, %v110
    %112 = vdwg.mxu0
    %v113 = vmax.f32 %v111, 0.0
    %v114 = vld [vmem:[%s3] sm:$0x3]
    %v115 = vld [vmem:[%s4] sm:$0x1]
    %v117 = vperm.slane %v115, 0
    %vm119 = vcmask 15360
    %v121 = vsel %vm119, %v113, 0
    %vm123 = vcmask 1041408
    %v125 = vsel %vm123, %v114, 0
    %127 = vmatpush.msra.mxu0 0.0
    %128 = vmatpush.msra.mxu0 0.0
    %129 = vmatpush.msra.mxu0 0.0
    %130 = vmatpush.msra.mxu0 0.0
    %131 = vmatpush.msra.mxu0 0.0
    %132 = vmatpush.msra.mxu0 0.0
    %133 = vmatpush.msra.mxu0 0.0
    %134 = vmatpush.msra.mxu0 0.0
    %135 = vmatpush.msra.mxu0 0.0
    %136 = vmatpush.msra.mxu0 0.0
    %137 = vmatpush.msra.mxu0 0.0
    %138 = vmatpush.msra.mxu0 0.0
    %139 = vmatpush.msra.mxu0 0.0
    %140 = vmatpush.msra.mxu0 0.0
    %141 = vmatpush.msra.mxu0 0.0
    %142 = vmatpush.msra.mxu0 %v125
    %143 = vmatmul.f32.gmra.mxu0 %v121
    %v144 = vpop.f32.mrf.mxu0
    %v145 = vadd.f32 %v117, %v144
    %146 = vdwg.mxu0
    %v147 = vxor.u32 %v145, 2147483648
    %v148 = vmul.f32 %v147, 1.442695
    %v149 = vpow.pop %v148
    %v150 = vadd.f32 %v149, 1.0
    %v151 = vrcp.pop %v150
    %v152 = vmul.f32 %v150, %v151
    %v153 = vsub.f32 1.0, %v152
    %v154 = vmul.f32 %v151, %v153
    %v155 = vadd.f32 %v151, %v154
    %vm156 = vweird.f32 %v150
    %vm157 = vweird.f32 %v151
    %vm158 = vmor %vm156, %vm157
    %v159 = vsel %vm158, %v151, %v155
    %v160 = vand.u32 2147483647, %v150
    %vm161 = vcmp.eq.f32.partialorder %v160, 8.507059e+37
    %v162 = vand.u32 %v150, 2147483648
    %v163 = vor.u32 1.1754944e-38, %v162
    %v164 = vsel %vm161, %v163, %v159
    %v165 = vmul.f32 1.0, %v164
    %v166 = vperm.slane %v165, 0
    %v167 = vlaneseq
    %v168 = vshrl.u32 %v167, 7
    %170 = vset.pattern.permute.xlu0 %v168
    %171 = vperm.xlu0 %170, %v166
    %v172 = vpop.permute.xlu0 %171
    %v173 = vlaneseq
    %v174 = vshrl.u32 %v173, 7
    %v175 = vadd.s32 %v174, 8
    %176 = vset.pattern.permute.xlu0 %v175
    %177 = vperm.xlu0 %176, %v166
    %v178 = vpop.permute.xlu0 %177
    %v179 = vperm.slane %v165, 1
    %v180 = vlaneseq
    %v181 = vshrl.u32 %v180, 7
    %183 = vset.pattern.permute.xlu0 %v181
    %184 = vperm.xlu0 %183, %v179
    %v185 = vpop.permute.xlu0 %184
    %v186 = vlaneseq
    %v187 = vshrl.u32 %v186, 7
    %v188 = vadd.s32 %v187, 8
    %189 = vset.pattern.permute.xlu0 %v188
    %190 = vperm.xlu0 %189, %v179
    %v191 = vpop.permute.xlu0 %190
    %v192 = vmul.f32 %v37, %v172
    %v193 = vmul.f32 %v38, %v172
    %v194 = vmul.f32 %v39, %v178
    %v195 = vmul.f32 %v40, %v178
    %v196 = vmul.f32 %v41, %v185
    %v197 = vmul.f32 %v42, %v185
    %v198 = vmul.f32 %v43, %v191
    %v199 = vmul.f32 %v44, %v191
    %200 = vst [vmem:[#allocation5] sm:$0xff] %v192
    %201 = vst [vmem:[#allocation5 + $0x8] sm:$0xff] %v193
    %202 = vst [vmem:[#allocation5 + $0x10] sm:$0xff] %v194
    %203 = vst [vmem:[#allocation5 + $0x18] sm:$0xff] %v195
    %204 = vst [vmem:[#allocation5 + $0x20] sm:$0xff] %v196
    %205 = vst [vmem:[#allocation5 + $0x28] sm:$0xff] %v197
    %206 = vst [vmem:[#allocation5 + $0x30] sm:$0xff] %v198
    %207 = vst [vmem:[#allocation5 + $0x38] sm:$0xff] %v199
    // Predicated region
    $region26: #{tpu_custom_call.1} parent=1 // pred_check
      _
    $region27: #{tpu_custom_call.1} parent=1 // pred_check_branch
      %209 = sbr.rel (0) target = $region29
    $region28: #{tpu_custom_call.1} parent=1 // pred_region
      %211 = vsyncadd [#allocation4], 0
      %s212 = sshll.u32 [#allocation5], 4
      %s213 = int_to_ptr.vmem [resolvable:$true] %s212
      %s214 = sshll.u32 %s5, 4
      %s215 = int_to_ptr.hbm [resolvable:$true] %s214
      %220 = dma.vmem_to_hbm [thread:$0]  %s213, 1024, %s215, [#allocation4], 256, 256, 16
    $region29: #{tpu_custom_call.1} parent=1 // pred_fallthru
      _
    // Predicated region
    $region30: #{tpu_custom_call.1} parent=1 // pred_check
      _
    $region31: #{tpu_custom_call.1} parent=1 // pred_check_branch
      %222 = sbr.rel (0) target = $region33
    $region32: #{tpu_custom_call.1} parent=1 // pred_region
      %224 = dma.done [#allocation4], 1024
    $region33: #{tpu_custom_call.1} parent=1 // pred_fallthru
      _
    %225 = vsyncpa [#allocation3], 1
    %226 = vsyncpa [#allocation4], 1

</llo_original>
